<compile_context>
chip_gen: v5e
topology: v5e:2x2
jax: 0.10.0
libtpu: 0.0.40
codegen_flags: <defaults>
</compile_context>

<pallas_src>
import jax
import jax.numpy as jnp
from jax.experimental import pallas as pl
from jax.experimental.pallas import tpu as pltpu


def _round_up(x, m):
    return (x + m - 1) // m * m


# --------------------------- fused GEMM + epilogue ---------------------------
# A:(tm,K) bf16, B:(K,tn) bf16, scale/bias:(1,tn) f32, [res:(tm,tn) f32]
# out = [relu]( A@B * scale + bias [+ res] )   (f32 accumulate / f32 epilogue)

def _gemm_bn_kernel(a_ref, b_ref, s_ref, c_ref, o_ref):
    acc = jnp.dot(a_ref[...], b_ref[...], preferred_element_type=jnp.float32)
    o_ref[...] = (acc * s_ref[...] + c_ref[...]).astype(o_ref.dtype)


def _gemm_bn_relu_kernel(a_ref, b_ref, s_ref, c_ref, o_ref):
    acc = jnp.dot(a_ref[...], b_ref[...], preferred_element_type=jnp.float32)
    o_ref[...] = jnp.maximum(acc * s_ref[...] + c_ref[...], 0.0).astype(o_ref.dtype)


def _gemm_bn_add_relu_kernel(a_ref, b_ref, s_ref, c_ref, r_ref, o_ref):
    acc = jnp.dot(a_ref[...], b_ref[...], preferred_element_type=jnp.float32)
    y = acc * s_ref[...] + c_ref[...] + r_ref[...]
    o_ref[...] = jnp.maximum(y, 0.0).astype(o_ref.dtype)


def fused_gemm(a, b, scale, bias, *, relu=False, residual=None):
    """(M,K)@(K,N) with fused per-column affine (BN), optional residual, ReLU."""
    M, K = a.shape
    K2, Nout = b.shape
    assert K == K2

    # Row tiling: match the (small) real M; pad only up to a multiple of 8.
    if M > 128:
        Mp = _round_up(M, 128)
        tm = 256 if Mp % 256 == 0 else 128
    else:
        Mp = _round_up(M, 8)
        tm = Mp
    # Column tiling: keep >=2 N tiles for wide layers (feeds both v7x TCs),
    # 128/256-aligned lanes for v5e/v6e MXU; full dim for small Cout (64, 4).
    if Nout % 256 == 0 and Nout >= 512:
        tn = 256
    elif Nout % 128 == 0:
        tn = 128
    else:
        tn = Nout

    a = a.astype(jnp.bfloat16)
    if Mp != M:
        a = jnp.pad(a, ((0, Mp - M), (0, 0)))
    b = b.astype(jnp.bfloat16)
    s2 = scale.reshape(1, Nout).astype(jnp.float32)
    c2 = bias.reshape(1, Nout).astype(jnp.float32)

    in_specs = [
        pl.BlockSpec((tm, K), lambda i, j: (i, 0)),   # full-K A tile (no pad)
        pl.BlockSpec((K, tn), lambda i, j: (0, j)),   # full-K B tile (no pad)
        pl.BlockSpec((1, tn), lambda i, j: (0, j)),   # BN scale
        pl.BlockSpec((1, tn), lambda i, j: (0, j)),   # BN bias
    ]
    args = [a, b, s2, c2]
    if residual is not None:
        r = residual.astype(jnp.float32)
        if Mp != M:
            r = jnp.pad(r, ((0, Mp - M), (0, 0)))
        in_specs.append(pl.BlockSpec((tm, tn), lambda i, j: (i, j)))
        args.append(r)
        kernel = _gemm_bn_add_relu_kernel
    else:
        kernel = _gemm_bn_relu_kernel if relu else _gemm_bn_kernel

    out = pl.pallas_call(
        kernel,
        out_shape=jax.ShapeDtypeStruct((Mp, Nout), jnp.float32),
        grid_spec=pltpu.PrefetchScalarGridSpec(
            num_scalar_prefetch=0,
            grid=(Mp // tm, Nout // tn),
            in_specs=in_specs,
            out_specs=pl.BlockSpec((tm, tn), lambda i, j: (i, j))),
        compiler_params=pltpu.CompilerParams(
            dimension_semantics=("parallel", "parallel")),
    )(*args)
    return out[:M] if Mp != M else out


# ------------------------------ conv / pooling -------------------------------

def conv2d_bn(x, w2d, scale, bias, *, ksize, stride, padding, relu,
              residual=None):
    """NHWC conv (im2col in XLA, bf16) + fused BN/ReLU/residual GEMM epilogue.

    w2d: (ksize*ksize*Cin, Cout), already bf16.
    """
    N, H, W, Cin = x.shape
    Cout = w2d.shape[1]
    OH = (H + 2 * padding - ksize) // stride + 1
    OW = (W + 2 * padding - ksize) // stride + 1

    xb = x.astype(jnp.bfloat16)                       # halve im2col HBM traffic
    if padding:
        xb = jnp.pad(xb, ((0, 0), (padding, padding), (padding, padding), (0, 0)))

    if ksize == 1:
        patches = xb[:, ::stride, ::stride, :]
    else:
        cols = []
        for ki in range(ksize):
            for kj in range(ksize):
                cols.append(xb[:, ki:ki + stride * OH:stride,
                                kj:kj + stride * OW:stride, :])
        patches = jnp.concatenate(cols, axis=-1)      # (N, OH, OW, k*k*Cin)

    a = patches.reshape(N * OH * OW, ksize * ksize * Cin)
    r2d = residual.reshape(N * OH * OW, Cout) if residual is not None else None
    out = fused_gemm(a, w2d, scale, bias, relu=relu, residual=r2d)
    return out.reshape(N, OH, OW, Cout)


def _maxpool3x3s2_kernel(x_ref, o_ref):
    # x_ref: (Hp, Wp, N, C) padded with -inf; strided taps hit only outer dims
    # (lane axis = C, sublane = N), so no cross-lane shuffles are needed.
    oh, ow = o_ref.shape[0], o_ref.shape[1]
    r = x_ref[pl.ds(0, oh, 2), pl.ds(0, ow, 2), :, :]
    for ki in range(3):
        for kj in range(3):
            if ki == 0 and kj == 0:
                continue
            r = jnp.maximum(r, x_ref[pl.ds(ki, oh, 2), pl.ds(kj, ow, 2), :, :])
    o_ref[...] = r


def maxpool3x3_s2(x):
    """3x3 max pool, stride 2, padding 1 (pad with -inf, PyTorch semantics).

    Single-block kernel: the pooled feature map here is tiny (<256 KiB), so one
    un-gridded read of x + one write of out is already at the HBM roofline.
    """
    N, H, W, C = x.shape
    OH = (H + 2 - 3) // 2 + 1
    OW = (W + 2 - 3) // 2 + 1
    neg = jnp.finfo(x.dtype).min
    xp = jnp.pad(x, ((0, 0), (1, 1), (1, 1), (0, 0)), constant_values=neg)
    xt = jnp.transpose(xp, (1, 2, 0, 3))              # (Hp, Wp, N, C)
    out = pl.pallas_call(
        _maxpool3x3s2_kernel,
        out_shape=jax.ShapeDtypeStruct((OH, OW, N, C), x.dtype),
    )(xt)
    return jnp.transpose(out, (2, 0, 1, 3))           # (N, OH, OW, C)


def _gap_kernel(x_ref, o_ref):
    hw = x_ref.shape[1]
    o_ref[...] = jnp.sum(x_ref[...], axis=1) * (1.0 / hw)


def global_avgpool(x):
    N, H, W, C = x.shape
    x3 = x.reshape(N, H * W, C)
    return pl.pallas_call(
        _gap_kernel, out_shape=jax.ShapeDtypeStruct((N, C), x.dtype)
    )(x3)


# ------------------------------ ResNet-34 model ------------------------------

def make_params(key, num_classes=4):
    keys = iter(jax.random.split(key, 64))

    def conv_w2d(kh, kw, cin, cout):
        fan_in = kh * kw * cin
        w = jax.random.normal(next(keys), (kh, kw, cin, cout),
                              jnp.float32) * (2.0 / fan_in) ** 0.5
        return w.reshape(kh * kw * cin, cout).astype(jnp.bfloat16)

    def bn_sb(c):
        eps = 1e-5
        # gamma=1, beta=0, running_mean=0, running_var=1 (PyTorch defaults)
        scale = jnp.full((c,), 1.0 / jnp.sqrt(1.0 + eps), jnp.float32)
        bias = jnp.zeros((c,), jnp.float32)
        return scale, bias

    params = {'conv1_w': conv_w2d(7, 7, 3, 64)}
    params['bn1_s'], params['bn1_b'] = bn_sb(64)

    layers_cfg = [(64, 3, 1), (128, 4, 2), (256, 6, 2), (512, 3, 2)]
    in_c = 64
    layers = []
    for out_c, n_blocks, first_stride in layers_cfg:
        blocks = []
        for bi in range(n_blocks):
            s = first_stride if bi == 0 else 1
            blk = {'stride': s,
                   'w1': conv_w2d(3, 3, in_c, out_c),
                   'w2': conv_w2d(3, 3, out_c, out_c)}
            blk['s1'], blk['b1'] = bn_sb(out_c)
            blk['s2'], blk['b2'] = bn_sb(out_c)
            if s != 1 or in_c != out_c:
                blk['down_w'] = conv_w2d(1, 1, in_c, out_c)
                blk['down_s'], blk['down_b'] = bn_sb(out_c)
            blocks.append(blk)
            in_c = out_c
        layers.append(blocks)
    params['layers'] = layers

    params['fc_w'] = (jax.random.normal(next(keys), (512, num_classes),
                                        jnp.float32) * (1.0 / 512.0) ** 0.5
                      ).astype(jnp.bfloat16)
    params['fc_b'] = jax.random.normal(next(keys), (num_classes,),
                                       jnp.float32) * 0.01
    params['fc_s'] = jnp.ones((num_classes,), jnp.float32)
    return params


def basic_block(x, blk):
    s = blk['stride']
    if 'down_w' in blk:
        identity = conv2d_bn(x, blk['down_w'], blk['down_s'], blk['down_b'],
                             ksize=1, stride=s, padding=0, relu=False)
    else:
        identity = x
    out = conv2d_bn(x, blk['w1'], blk['s1'], blk['b1'],
                    ksize=3, stride=s, padding=1, relu=True)
    # conv2 + BN2 + residual add + ReLU, all in the GEMM epilogue
    out = conv2d_bn(out, blk['w2'], blk['s2'], blk['b2'],
                    ksize=3, stride=1, padding=1, relu=True, residual=identity)
    return out


def resnet34_forward(params, x_nchw):
    x = jnp.transpose(x_nchw.astype(jnp.float32), (0, 2, 3, 1))   # NCHW -> NHWC

    x = conv2d_bn(x, params['conv1_w'], params['bn1_s'], params['bn1_b'],
                  ksize=7, stride=2, padding=3, relu=True)
    x = maxpool3x3_s2(x)

    for blocks in params['layers']:
        for blk in blocks:
            x = basic_block(x, blk)

    feat = global_avgpool(x)                                      # (N, 512)
    # FC with the bias folded into the GEMM epilogue (scale = 1)
    logits = fused_gemm(feat, params['fc_w'], params['fc_s'], params['fc_b'])
    return logits


# ----------------------------------- main ------------------------------------

if __name__ == "__main__":
    key = jax.random.PRNGKey(0)
    k_params, k_x = jax.random.split(key)

    params = make_params(k_params, num_classes=4)
    # Small deterministic input consistent with the module: NCHW, 3 channels.
    x = jax.random.normal(k_x, (2, 3, 32, 32), jnp.float32)

    logits = resnet34_forward(params, x)
    logits = jax.block_until_ready(logits)
    assert logits.shape == (2, 4)
    assert bool(jnp.all(jnp.isfinite(logits)))
    print("KERNEL_OK")
</pallas_src>

<mosaic_0001>
module attributes {stable_mosaic.version = 11 : i64} {
  func.func @_gemm_bn_relu_kernel(%arg0: i32, %arg1: i32, %arg2: memref<256x147xbf16, #tpu.memory_space<vmem>>, %arg3: memref<147x64xbf16, #tpu.memory_space<vmem>>, %arg4: memref<1x64xf32, #tpu.memory_space<vmem>>, %arg5: memref<1x64xf32, #tpu.memory_space<vmem>>, %arg6: memref<256x64xf32, #tpu.memory_space<vmem>>) attributes {dimension_semantics = [#tpu.dimension_semantics<parallel>, #tpu.dimension_semantics<parallel>], iteration_bounds = array<i64: 2, 1>, scalar_prefetch = 0 : i64, scratch_operands = 0 : i64, tpu.core_type = #tpu.core_type<tc>, window_params = [{transform_indices = @transform_0, window_bounds = array<i64: 256, 147>}, {transform_indices = @transform_1, window_bounds = array<i64: 147, 64>}, {transform_indices = @transform_2, window_bounds = array<i64: 1, 64>}, {transform_indices = @transform_3, window_bounds = array<i64: 1, 64>}, {transform_indices = @transform_4, window_bounds = array<i64: 256, 64>}]} {
    %c0 = arith.constant 0 : index
    %c0_0 = arith.constant 0 : index
    %0 = vector.load %arg2[%c0, %c0_0] : memref<256x147xbf16, #tpu.memory_space<vmem>>, vector<256x147xbf16>
    %c0_1 = arith.constant 0 : index
    %c0_2 = arith.constant 0 : index
    %1 = vector.load %arg3[%c0_1, %c0_2] : memref<147x64xbf16, #tpu.memory_space<vmem>>, vector<147x64xbf16>
    %cst = arith.constant dense<0.000000e+00> : vector<256x64xf32>
    %2 = tpu.matmul %0, %1, %cst {dimension_numbers = #tpu.dot_dimension_numbers<[1], [0], [0], [1], [0, 0, 1, 1], [], []>} : vector<256x147xbf16>, vector<147x64xbf16>, vector<256x64xf32> -> vector<256x64xf32>
    %c0_3 = arith.constant 0 : index
    %c0_4 = arith.constant 0 : index
    %3 = vector.load %arg4[%c0_3, %c0_4] : memref<1x64xf32, #tpu.memory_space<vmem>>, vector<1x64xf32>
    %4 = vector.broadcast %3 : vector<1x64xf32> to vector<256x64xf32>
    %5 = arith.mulf %2, %4 : vector<256x64xf32>
    %c0_5 = arith.constant 0 : index
    %c0_6 = arith.constant 0 : index
    %6 = vector.load %arg5[%c0_5, %c0_6] : memref<1x64xf32, #tpu.memory_space<vmem>>, vector<1x64xf32>
    %7 = vector.broadcast %6 : vector<1x64xf32> to vector<256x64xf32>
    %8 = arith.addf %5, %7 : vector<256x64xf32>
    %cst_7 = arith.constant 0.000000e+00 : f32
    %9 = vector.broadcast %cst_7 : f32 to vector<256x64xf32>
    %10 = arith.maximumf %8, %9 : vector<256x64xf32>
    %c0_8 = arith.constant 0 : index
    %c0_9 = arith.constant 0 : index
    %11 = vector.load %arg6[%c0_8, %c0_9] : memref<256x64xf32, #tpu.memory_space<vmem>>, vector<256x64xf32>
    tpu.vector_store %arg6[%c0_8, %c0_9], %10 {strides = array<i32>} : memref<256x64xf32, #tpu.memory_space<vmem>>, vector<256x64xf32>,
    return
  }
  func.func @transform_0(%arg0: i32, %arg1: i32) -> (i32, i32) {
    %c0_i32 = arith.constant 0 : i32
    %c0_i32_0 = arith.constant 0 : i32
    return %arg0, %c0_i32 : i32, i32
  }
  func.func @transform_1(%arg0: i32, %arg1: i32) -> (i32, i32) {
    %c0_i32 = arith.constant 0 : i32
    %c0_i32_0 = arith.constant 0 : i32
    return %c0_i32, %arg1 : i32, i32
  }
  func.func @transform_2(%arg0: i32, %arg1: i32) -> (i32, i32) {
    %c0_i32 = arith.constant 0 : i32
    %c0_i32_0 = arith.constant 0 : i32
    return %c0_i32, %arg1 : i32, i32
  }
  func.func @transform_3(%arg0: i32, %arg1: i32) -> (i32, i32) {
    %c0_i32 = arith.constant 0 : i32
    %c0_i32_0 = arith.constant 0 : i32
    return %c0_i32, %arg1 : i32, i32
  }
  func.func @transform_4(%arg0: i32, %arg1: i32) -> (i32, i32) {
    %c0_i32 = arith.constant 0 : i32
    return %arg0, %arg1 : i32, i32
  }
}

</mosaic_0001>

<llo_original>
// kernel: tpu_custom_call.1
$region0: #{tpu_custom_call.1}
  #allocation0 [shape = 'u32[]', space=smem, size = 0x4, offset = 0x4, fixed_abs, tag = 'smem constant byte address 0x4 - core index']
  #allocation1 [shape = 'u32[72,128]{1,0:T(1,128)}', space=vmem, size = 0x9000, scoped, tag = 'internal scratch']
  %s0 = inlined_call_operand.vmem [shape: bf16[512,147], index: 0, kind: input, shape index: {}]
  %s1 = inlined_call_operand.vmem [shape: bf16[147,64], index: 1, kind: input, shape index: {}]
  %s2 = inlined_call_operand.vmem [shape: f32[1,64], index: 2, kind: input, shape index: {}]
  %s3 = inlined_call_operand.vmem [shape: f32[1,64], index: 3, kind: input, shape index: {}]
  %s4 = inlined_call_operand.vmem [shape: f32[512,64], index: 4, kind: output, shape index: {}]
  %s5 = sld [smem:[#allocation0]]
  $region49: #{tpu_custom_call.1} parent=0
    _
  %s7 = ssub.s32 1, %s5
  %s8 = scalar_select 0, %s7, %s5
  loop: start=0, step=1, limit=4
  $region2: #{tpu_custom_call.1} parent=0 // loop_pre_header
    _
  $region3: #{tpu_custom_call.1} parent=0 // loop_header
    %s10 = sphi 0, %s14
    %p11 = scmp.ge.s32.totalorder %s10, 4
    %s17 = sphi 0, %s29
    %s18 = sphi 0, %s25
    %s19 = sphi 0, %s17
    %s20 = sphi 0, %s18
    %s21 = sphi 0, %s19
    %s22 = sphi 0, %s20
    %s32 = sphi 0, %s34
    %s35 = sphi 0, %s32
    %s36 = sphi 0, %s35
    %s52 = sphi 0, %s36
    %s58 = sphi 0, %s60
    %s61 = sphi 0, %s58
    %s62 = sphi 0, %s61
    %s78 = sphi 0, %s62
    %s84 = sphi 0, %s86
    %s87 = sphi 0, %s84
    %s88 = sphi 0, %s87
    %s104 = sphi 0, %s88
    %s110 = sphi 0, %s112
    %s113 = sphi 0, %s110
    %s114 = sphi 0, %s113
    %s130 = sphi 0, %s114
    %s138 = sphi 0, %s140
    %s141 = sphi 0, %s138
    %s142 = sphi 0, %s141
    %s158 = sphi 0, %s142
  $region4: #{tpu_custom_call.1} parent=0 // loop_header_branch
    %13 = sbr.rel (%p11) target = $region8
  $region5: #{tpu_custom_call.1} parent=0 // loop_body
    %s15 = ssub.s32 %s10, 1
    %s16 = ssub.s32 %s10, 2
    %s23 = sadd.s32 1, %s18
    %p24 = scmp.ge.s32.totalorder %s23, 1
    %s25 = scalar_select %p24, 0, %s23
    %s26 = sadd.s32 1, %s17
    %s27 = scalar_select %p24, %s26, %s17
    %p28 = scmp.ge.s32.totalorder %s27, 2
    %s29 = scalar_select %p28, 0, %s27
    %s30 = ssub.s32 %s17, %s29
    %p31 = scmp.eq.s32.totalorder %s30, 0
    %s33 = sadd.s32 %s32, 1
    %s34 = scalar_select %p31, %s32, %s33
    %p37 = pneg %p31
    %p38 = scmp.eq.s32.totalorder %s10, 1
    %p39 = por %p37, %p38
    %p40 = scmp.ne.s32.totalorder %s32, %s35
    %p41 = scmp.eq.s32.totalorder %s10, 0
    %p42 = por %p40, %p41
    %p43 = scmp.ne.s32.totalorder %s32, %s35
    %p44 = scmp.eq.s32.totalorder %s15, 1
    %p45 = por %p43, %p44
    %p46 = scmp.ne.s32.totalorder %s35, %s36
    %p47 = scmp.eq.s32.totalorder %s15, 0
    %p48 = por %p46, %p47
    %p49 = scmp.ne.s32.totalorder %s35, %s36
    %p50 = scmp.eq.s32.totalorder %s16, 1
    %p51 = por %p49, %p50
    %p53 = scmp.ne.s32.totalorder %s36, %s52
    %p54 = scmp.eq.s32.totalorder %s16, 0
    %p55 = por %p53, %p54
    %s56 = ssub.s32 %s18, %s25
    %p57 = scmp.eq.s32.totalorder %s56, 0
    %s59 = sadd.s32 %s58, 1
    %s60 = scalar_select %p57, %s58, %s59
    %p63 = pneg %p57
    %p64 = scmp.eq.s32.totalorder %s10, 1
    %p65 = por %p63, %p64
    %p66 = scmp.ne.s32.totalorder %s58, %s61
    %p67 = scmp.eq.s32.totalorder %s10, 0
    %p68 = por %p66, %p67
    %p69 = scmp.ne.s32.totalorder %s58, %s61
    %p70 = scmp.eq.s32.totalorder %s15, 1
    %p71 = por %p69, %p70
    %p72 = scmp.ne.s32.totalorder %s61, %s62
    %p73 = scmp.eq.s32.totalorder %s15, 0
    %p74 = por %p72, %p73
    %p75 = scmp.ne.s32.totalorder %s61, %s62
    %p76 = scmp.eq.s32.totalorder %s16, 1
    %p77 = por %p75, %p76
    %p79 = scmp.ne.s32.totalorder %s62, %s78
    %p80 = scmp.eq.s32.totalorder %s16, 0
    %p81 = por %p79, %p80
    %s82 = ssub.s32 %s18, %s25
    %p83 = scmp.eq.s32.totalorder %s82, 0
    %s85 = sadd.s32 %s84, 1
    %s86 = scalar_select %p83, %s84, %s85
    %p89 = pneg %p83
    %p90 = scmp.eq.s32.totalorder %s10, 1
    %p91 = por %p89, %p90
    %p92 = scmp.ne.s32.totalorder %s84, %s87
    %p93 = scmp.eq.s32.totalorder %s10, 0
    %p94 = por %p92, %p93
    %p95 = scmp.ne.s32.totalorder %s84, %s87
    %p96 = scmp.eq.s32.totalorder %s15, 1
    %p97 = por %p95, %p96
    %p98 = scmp.ne.s32.totalorder %s87, %s88
    %p99 = scmp.eq.s32.totalorder %s15, 0
    %p100 = por %p98, %p99
    %p101 = scmp.ne.s32.totalorder %s87, %s88
    %p102 = scmp.eq.s32.totalorder %s16, 1
    %p103 = por %p101, %p102
    %p105 = scmp.ne.s32.totalorder %s88, %s104
    %p106 = scmp.eq.s32.totalorder %s16, 0
    %p107 = por %p105, %p106
    %s108 = ssub.s32 %s18, %s25
    %p109 = scmp.eq.s32.totalorder %s108, 0
    %s111 = sadd.s32 %s110, 1
    %s112 = scalar_select %p109, %s110, %s111
    %p115 = pneg %p109
    %p116 = scmp.eq.s32.totalorder %s10, 1
    %p117 = por %p115, %p116
    %p118 = scmp.ne.s32.totalorder %s110, %s113
    %p119 = scmp.eq.s32.totalorder %s10, 0
    %p120 = por %p118, %p119
    %p121 = scmp.ne.s32.totalorder %s110, %s113
    %p122 = scmp.eq.s32.totalorder %s15, 1
    %p123 = por %p121, %p122
    %p124 = scmp.ne.s32.totalorder %s113, %s114
    %p125 = scmp.eq.s32.totalorder %s15, 0
    %p126 = por %p124, %p125
    %p127 = scmp.ne.s32.totalorder %s113, %s114
    %p128 = scmp.eq.s32.totalorder %s16, 1
    %p129 = por %p127, %p128
    %p131 = scmp.ne.s32.totalorder %s114, %s130
    %p132 = scmp.eq.s32.totalorder %s16, 0
    %p133 = por %p131, %p132
    %s134 = ssub.s32 %s17, %s29
    %s135 = ssub.s32 %s18, %s25
    %s136 = sor.u32 %s134, %s135
    %p137 = scmp.eq.s32.totalorder %s136, 0
    %s139 = sadd.s32 %s138, 1
    %s140 = scalar_select %p137, %s138, %s139
    %p143 = pneg %p137
    %p144 = scmp.eq.s32.totalorder %s10, 1
    %p145 = por %p143, %p144
    %p146 = scmp.ne.s32.totalorder %s138, %s141
    %p147 = scmp.eq.s32.totalorder %s10, 0
    %p148 = por %p146, %p147
    %p149 = scmp.ne.s32.totalorder %s138, %s141
    %p150 = scmp.eq.s32.totalorder %s15, 1
    %p151 = por %p149, %p150
    %p152 = scmp.ne.s32.totalorder %s141, %s142
    %p153 = scmp.eq.s32.totalorder %s15, 0
    %p154 = por %p152, %p153
    %p155 = scmp.ne.s32.totalorder %s141, %s142
    %p156 = scmp.eq.s32.totalorder %s16, 1
    %p157 = por %p155, %p156
    %p159 = scmp.ne.s32.totalorder %s142, %s158
    %p160 = scmp.eq.s32.totalorder %s16, 0
    %p161 = por %p159, %p160
    %p162 = scmp.le.s32.totalorder 1, %s10
    %p163 = scmp.lt.s32.totalorder %s10, 3
    %p164 = pnand %p162, %p163
    %p165 = pneg %p164
    // Predicated region
    $region9: #{tpu_custom_call.1} parent=5 // pred_check
      _
    $region10: #{tpu_custom_call.1} parent=5 // pred_check_branch
      %167 = sbr.rel (%p164) target = $region12
    $region11: #{tpu_custom_call.1} parent=5 // pred_region
      %s168 = ssub.s32 %s10, 1
      // Predicated region
      $region13: #{tpu_custom_call.1} parent=11 // pred_check
        %p169 = pneg %p74
      $region14: #{tpu_custom_call.1} parent=11 // pred_check_branch
        %171 = sbr.rel (%p169) target = $region16
      $region15: #{tpu_custom_call.1} parent=11 // pred_region
        %p172 = scmp.lt.s32.totalorder %s20, 0
        %s173 = scalar_select %p172, %s20, 0
        %s174 = smul.addr %s173, 4
        %s175 = scalar_lea.vmem %s1, %s174
      $region16: #{tpu_custom_call.1} parent=11 // pred_fallthru
        _
      // Predicated region
      $region17: #{tpu_custom_call.1} parent=11 // pred_check
        %p176 = pneg %p100
      $region18: #{tpu_custom_call.1} parent=11 // pred_check_branch
        %178 = sbr.rel (%p176) target = $region20
      $region19: #{tpu_custom_call.1} parent=11 // pred_region
        %p179 = scmp.lt.s32.totalorder %s20, 0
        %s180 = scalar_select %p179, %s20, 0
        %s181 = scalar_lea.vmem %s2, %s180
      $region20: #{tpu_custom_call.1} parent=11 // pred_fallthru
        _
      // Predicated region
      $region21: #{tpu_custom_call.1} parent=11 // pred_check
        %p182 = pneg %p126
      $region22: #{tpu_custom_call.1} parent=11 // pred_check_branch
        %184 = sbr.rel (%p182) target = $region24
      $region23: #{tpu_custom_call.1} parent=11 // pred_region
        %p185 = scmp.lt.s32.totalorder %s20, 0
        %s186 = scalar_select %p185, %s20, 0
        %s187 = scalar_lea.vmem %s3, %s186
      $region24: #{tpu_custom_call.1} parent=11 // pred_fallthru
        _
    $region12: #{tpu_custom_call.1} parent=5 // pred_fallthru
      _
    %p188 = scmp.lt.s32.totalorder %s10, 2
    // Predicated region
    $region25: #{tpu_custom_call.1} parent=5 // pred_check
      %p189 = pneg %p188
    $region26: #{tpu_custom_call.1} parent=5 // pred_check_branch
      %191 = sbr.rel (%p189) target = $region28
    $region27: #{tpu_custom_call.1} parent=5 // pred_region
      // Predicated region
      $region29: #{tpu_custom_call.1} parent=27 // pred_check
        %p192 = pneg %p42
      $region30: #{tpu_custom_call.1} parent=27 // pred_check_branch
        %194 = sbr.rel (%p192) target = $region32
      $region31: #{tpu_custom_call.1} parent=27 // pred_region
        %s195 = smul.u32 32, %s17
        %p196 = scmp.lt.s32.totalorder %s195, 63
        %s197 = scalar_select %p196, %s195, 63
        %s198 = smul.addr %s197, 2
        %s199 = smul.addr %s198, 4
        %s200 = scalar_lea.vmem %s0, %s199
        %s201 = smul.u32 32, %s17
      $region32: #{tpu_custom_call.1} parent=27 // pred_fallthru
        _
    $region28: #{tpu_custom_call.1} parent=5 // pred_fallthru
      _
    %p202 = scmp.le.s32.totalorder 1, %s10
    %p203 = scmp.lt.s32.totalorder %s10, 3
    %p204 = pnand %p202, %p203
    %p205 = pneg %p204
    // Predicated region
    $region33: #{tpu_custom_call.1} parent=5 // pred_check
      _
    $region34: #{tpu_custom_call.1} parent=5 // pred_check_branch
      %207 = sbr.rel (%p204) target = $region36
    $region35: #{tpu_custom_call.1} parent=5 // pred_region
      %s208 = ssub.s32 %s10, 1
      %s209 = smul.u32 32, %s19
      %p210 = scmp.lt.s32.totalorder %s209, 63
      %s211 = scalar_select %p210, %s209, 63
      %s212 = smul.addr %s211, 2
      %s213 = smul.addr %s212, 4
      %s214 = scalar_lea.vmem %s0, %s213
      %p215 = pneg %p48
      %p216 = pneg %p45
      %p217 = scmp.lt.s32.totalorder %s20, 0
      %s218 = scalar_select %p217, %s20, 0
      %s219 = smul.addr %s218, 4
      %s220 = scalar_lea.vmem %s1, %s219
      %p221 = pneg %p74
      %p222 = pneg %p71
      %p223 = scmp.lt.s32.totalorder %s20, 0
      %s224 = scalar_select %p223, %s20, 0
      %s225 = scalar_lea.vmem %s2, %s224
      %p226 = pneg %p100
      %p227 = pneg %p97
      %p228 = scmp.lt.s32.totalorder %s20, 0
      %s229 = scalar_select %p228, %s20, 0
      %s230 = scalar_lea.vmem %s3, %s229
      %p231 = pneg %p126
      %p232 = pneg %p123
      %p233 = pneg %p154
      %p234 = pneg %p151
      %s235 = smul.u32 32, %s19
      %p236 = scmp.lt.s32.totalorder %s235, 63
      %s237 = scalar_select %p236, %s235, 63
      %p238 = scmp.lt.s32.totalorder %s20, 0
      %s239 = scalar_select %p238, %s20, 0
      %s240 = sadd.s32 %s239, %s237
      %s241 = smul.addr %s240, 8
      %s242 = scalar_lea.vmem %s4, %s241
      %s243 = smul.u32 32, %s19
      %p244 = scmp.lt.s32.totalorder %s243, 63
      %s245 = scalar_select %p244, %s243, 63
      %s246 = smul.addr %s245, 2
      %s247 = smul.addr %s246, 4
      %s248 = scalar_lea.vmem %s0, %s247
      %s249 = smul.u32 32, %s19
      %p250 = scmp.lt.s32.totalorder %s20, 0
      %s251 = scalar_select %p250, %s20, 0
      %s252 = smul.addr %s251, 4
      %s253 = scalar_lea.vmem %s1, %s252
      %p254 = scmp.lt.s32.totalorder %s20, 0
      %s255 = scalar_select %p254, %s20, 0
      %s256 = scalar_lea.vmem %s2, %s255
      %p257 = scmp.lt.s32.totalorder %s20, 0
      %s258 = scalar_select %p257, %s20, 0
      %s259 = scalar_lea.vmem %s3, %s258
      %s260 = smul.u32 32, %s19
      %p261 = scmp.lt.s32.totalorder %s260, 63
      %s262 = scalar_select %p261, %s260, 63
      %p263 = scmp.lt.s32.totalorder %s20, 0
      %s264 = scalar_select %p263, %s20, 0
      %s265 = sadd.s32 %s264, %s262
      %s266 = smul.addr %s265, 8
      %s267 = scalar_lea.vmem %s4, %s266
      %s268 = smul.u32 32, %s19
      %v270 = vld [vmem:[%s248] sm:$0xff]
      %v271 = vld [vmem:[%s248 + $0x8] sm:$0xff]
      %v272 = vld [vmem:[%s248 + $0x10] sm:$0xff]
      %v273 = vld [vmem:[%s248 + $0x18] sm:$0xff]
      %v274 = vld [vmem:[%s248 + $0x20] sm:$0xff]
      %v275 = vld [vmem:[%s248 + $0x28] sm:$0xff]
      %v276 = vld [vmem:[%s248 + $0x30] sm:$0xff]
      %v277 = vld [vmem:[%s248 + $0x38] sm:$0xff]
      %v278 = vld [vmem:[%s248 + $0x40] sm:$0xff]
      %v279 = vld [vmem:[%s248 + $0x48] sm:$0xff]
      %v280 = vld [vmem:[%s248 + $0x50] sm:$0xff]
      %v281 = vld [vmem:[%s248 + $0x58] sm:$0xff]
      %v282 = vld [vmem:[%s248 + $0x60] sm:$0xff]
      %v283 = vld [vmem:[%s248 + $0x68] sm:$0xff]
      %v284 = vld [vmem:[%s248 + $0x70] sm:$0xff]
      %v285 = vld [vmem:[%s248 + $0x78] sm:$0xff]
      %v286 = vld [vmem:[%s248 + $0x80] sm:$0xff]
      %v287 = vld [vmem:[%s248 + $0x88] sm:$0xff]
      %v288 = vld [vmem:[%s248 + $0x90] sm:$0xff]
      %v289 = vld [vmem:[%s248 + $0x98] sm:$0xff]
      %v290 = vld [vmem:[%s248 + $0xa0] sm:$0xff]
      %v291 = vld [vmem:[%s248 + $0xa8] sm:$0xff]
      %v292 = vld [vmem:[%s248 + $0xb0] sm:$0xff]
      %v293 = vld [vmem:[%s248 + $0xb8] sm:$0xff]
      %v294 = vld [vmem:[%s248 + $0xc0] sm:$0xff]
      %v295 = vld [vmem:[%s248 + $0xc8] sm:$0xff]
      %v296 = vld [vmem:[%s248 + $0xd0] sm:$0xff]
      %v297 = vld [vmem:[%s248 + $0xd8] sm:$0xff]
      %v298 = vld [vmem:[%s248 + $0xe0] sm:$0xff]
      %v299 = vld [vmem:[%s248 + $0xe8] sm:$0xff]
      %v300 = vld [vmem:[%s248 + $0xf0] sm:$0xff]
      %v301 = vld [vmem:[%s248 + $0xf8] sm:$0xff]
      %v302 = vld [vmem:[%s253] sm:$0xf]
      %v303 = vld [vmem:[%s253 + $0x4] sm:$0xf]
      %v304 = vld [vmem:[%s253 + $0x8] sm:$0xf]
      %v305 = vld [vmem:[%s253 + $0xc] sm:$0xf]
      %v306 = vld [vmem:[%s253 + $0x10] sm:$0xf]
      %v307 = vld [vmem:[%s253 + $0x14] sm:$0xf]
      %v308 = vld [vmem:[%s253 + $0x18] sm:$0xf]
      %v309 = vld [vmem:[%s253 + $0x1c] sm:$0xf]
      %v310 = vld [vmem:[%s253 + $0x20] sm:$0xf]
      %v311 = vld [vmem:[%s253 + $0x24] sm:$0xf]
      %v312 = vld [vmem:[%s253 + $0x28] sm:$0xf]
      %v313 = vld [vmem:[%s253 + $0x2c] sm:$0xf]
      %v314 = vld [vmem:[%s253 + $0x30] sm:$0xf]
      %v315 = vld [vmem:[%s253 + $0x34] sm:$0xf]
      %v316 = vld [vmem:[%s253 + $0x38] sm:$0xf]
      %v317 = vld [vmem:[%s253 + $0x3c] sm:$0xf]
      %v318 = vld [vmem:[%s253 + $0x40] sm:$0xf]
      %v319 = vld [vmem:[%s253 + $0x44] sm:$0xf]
      %v320 = vld [vmem:[%s253 + $0x48] sm:$0x3]
      %v353 = vunpack.c.l.b16 %v270
      %v354 = vunpack.c.h.b16 %v270
      %v355 = vunpack.c.l.b16 %v271
      %v356 = vunpack.c.h.b16 %v271
      %v357 = vunpack.c.l.b16 %v272
      %v358 = vunpack.c.h.b16 %v272
      %v359 = vunpack.c.l.b16 %v273
      %v360 = vunpack.c.h.b16 %v273
      %v361 = vunpack.c.l.b16 %v274
      %v362 = vunpack.c.h.b16 %v274
      %v363 = vunpack.c.l.b16 %v275
      %v364 = vunpack.c.h.b16 %v275
      %v365 = vunpack.c.l.b16 %v276
      %v366 = vunpack.c.h.b16 %v276
      %v367 = vunpack.c.l.b16 %v277
      %v368 = vunpack.c.h.b16 %v277
      %v369 = vunpack.c.l.b16 %v278
      %v370 = vunpack.c.h.b16 %v278
      %v371 = vunpack.c.l.b16 %v279
      %v372 = vunpack.c.h.b16 %v279
      %v373 = vunpack.c.l.b16 %v280
      %v374 = vunpack.c.h.b16 %v280
      %v375 = vunpack.c.l.b16 %v281
      %v376 = vunpack.c.h.b16 %v281
      %v377 = vunpack.c.l.b16 %v282
      %v378 = vunpack.c.h.b16 %v282
      %v379 = vunpack.c.l.b16 %v283
      %v380 = vunpack.c.h.b16 %v283
      %v381 = vunpack.c.l.b16 %v284
      %v382 = vunpack.c.h.b16 %v284
      %v383 = vunpack.c.l.b16 %v285
      %v384 = vunpack.c.h.b16 %v285
      %v385 = vunpack.c.l.b16 %v286
      %v386 = vunpack.c.h.b16 %v286
      %v387 = vunpack.c.l.b16 %v287
      %v388 = vunpack.c.h.b16 %v287
      %v389 = vunpack.c.l.b16 %v288
      %v390 = vunpack.c.h.b16 %v288
      %v391 = vunpack.c.l.b16 %v289
      %v392 = vunpack.c.h.b16 %v289
      %v393 = vunpack.c.l.b16 %v290
      %v394 = vunpack.c.h.b16 %v290
      %v395 = vunpack.c.l.b16 %v291
      %v396 = vunpack.c.h.b16 %v291
      %v397 = vunpack.c.l.b16 %v292
      %v398 = vunpack.c.h.b16 %v292
      %v399 = vunpack.c.l.b16 %v293
      %v400 = vunpack.c.h.b16 %v293
      %v401 = vunpack.c.l.b16 %v294
      %v402 = vunpack.c.h.b16 %v294
      %v403 = vunpack.c.l.b16 %v295
      %v404 = vunpack.c.h.b16 %v295
      %v405 = vunpack.c.l.b16 %v296
      %v406 = vunpack.c.h.b16 %v296
      %v407 = vunpack.c.l.b16 %v297
      %v408 = vunpack.c.h.b16 %v297
      %v409 = vunpack.c.l.b16 %v298
      %v410 = vunpack.c.h.b16 %v298
      %v411 = vunpack.c.l.b16 %v299
      %v412 = vunpack.c.h.b16 %v299
      %v413 = vunpack.c.l.b16 %v300
      %v414 = vunpack.c.h.b16 %v300
      %v415 = vunpack.c.l.b16 %v301
      %v416 = vunpack.c.h.b16 %v301
      %v417 = vpack.c.b16 %v355, %v353
      %v418 = vpack.c.b16 %v356, %v354
      %v419 = vpack.c.b16 %v359, %v357
      %v420 = vpack.c.b16 %v360, %v358
      %v421 = vpack.c.b16 %v363, %v361
      %v422 = vpack.c.b16 %v364, %v362
      %v423 = vpack.c.b16 %v367, %v365
      %v424 = vpack.c.b16 %v368, %v366
      %v425 = vpack.c.b16 %v371, %v369
      %v426 = vpack.c.b16 %v372, %v370
      %v427 = vpack.c.b16 %v375, %v373
      %v428 = vpack.c.b16 %v376, %v374
      %v429 = vpack.c.b16 %v379, %v377
      %v430 = vpack.c.b16 %v380, %v378
      %v431 = vpack.c.b16 %v383, %v381
      %v432 = vpack.c.b16 %v384, %v382
      %v433 = vpack.c.b16 %v387, %v385
      %v434 = vpack.c.b16 %v388, %v386
      %v435 = vpack.c.b16 %v391, %v389
      %v436 = vpack.c.b16 %v392, %v390
      %v437 = vpack.c.b16 %v395, %v393
      %v438 = vpack.c.b16 %v396, %v394
      %v439 = vpack.c.b16 %v399, %v397
      %v440 = vpack.c.b16 %v400, %v398
      %v441 = vpack.c.b16 %v403, %v401
      %v442 = vpack.c.b16 %v404, %v402
      %v443 = vpack.c.b16 %v407, %v405
      %v444 = vpack.c.b16 %v408, %v406
      %v445 = vpack.c.b16 %v411, %v409
      %v446 = vpack.c.b16 %v412, %v410
      %v447 = vpack.c.b16 %v415, %v413
      %v448 = vpack.c.b16 %v416, %v414
      %v484 = vunpack.c.l.b16 %v302
      %v485 = vunpack.c.l.b16 %v303
      %v486 = vunpack.c.l.b16 %v304
      %v487 = vunpack.c.l.b16 %v305
      %v488 = vunpack.c.l.b16 %v306
      %v489 = vunpack.c.l.b16 %v307
      %v490 = vunpack.c.l.b16 %v308
      %v491 = vunpack.c.l.b16 %v309
      %v492 = vunpack.c.l.b16 %v310
      %v493 = vunpack.c.l.b16 %v311
      %v494 = vunpack.c.l.b16 %v312
      %v495 = vunpack.c.l.b16 %v313
      %v496 = vunpack.c.l.b16 %v314
      %v497 = vunpack.c.l.b16 %v315
      %v498 = vunpack.c.l.b16 %v316
      %v499 = vunpack.c.l.b16 %v317
      %v500 = vunpack.c.l.b16 %v318
      %v501 = vunpack.c.l.b16 %v319
      %v502 = vunpack.c.l.b16 %v320
      %v503 = vpack.c.b16 %v485, %v484
      %v504 = vpack.c.b16 %v487, %v486
      %v505 = vpack.c.b16 %v489, %v488
      %v506 = vpack.c.b16 %v491, %v490
      %v507 = vpack.c.b16 %v493, %v492
      %v508 = vpack.c.b16 %v495, %v494
      %v509 = vpack.c.b16 %v497, %v496
      %v510 = vpack.c.b16 %v499, %v498
      %v511 = vpack.c.b16 %v501, %v500
      %v512 = vpack.c.b16 %v502, %v502
      %vm522 = vcmask 154624
      %v524 = vsel %vm522, %v418, 0
      %v527 = vsel %vm522, %v420, 0
      %v530 = vsel %vm522, %v422, 0
      %v533 = vsel %vm522, %v424, 0
      %v536 = vsel %vm522, %v426, 0
      %v539 = vsel %vm522, %v428, 0
      %v542 = vsel %vm522, %v430, 0
      %v545 = vsel %vm522, %v432, 0
      %v548 = vsel %vm522, %v434, 0
      %v551 = vsel %vm522, %v436, 0
      %v554 = vsel %vm522, %v438, 0
      %v557 = vsel %vm522, %v440, 0
      %v560 = vsel %vm522, %v442, 0
      %v563 = vsel %vm522, %v444, 0
      %v566 = vsel %vm522, %v446, 0
      %v569 = vsel %vm522, %v448, 0
      %vm571 = vcmask 1040384
      %vm572 = vcmask 1041408
      %v573 = vsel %vm571, 4294967295, 65535
      %v574 = vsel %vm572, %v573, 0
      %v576 = vand.u32 %v512, %v574
      %578 = vmatpush.bf16.msra.mxu0 %v510
      %579 = vmatpush.bf16.msra.mxu0 %v509
      %580 = vmatpush.bf16.msra.mxu0 %v508
      %581 = vmatpush.bf16.msra.mxu0 %v507
      %582 = vmatpush.bf16.msra.mxu0 %v506
      %583 = vmatpush.bf16.msra.mxu0 %v505
      %584 = vmatpush.bf16.msra.mxu0 %v504
      %585 = vmatpush.bf16.msra.mxu0 %v503
      %586 = vmatmul.bf16.gmra.mxu0 %v417
      %v587 = vpop.f32.mrf.mxu0
      %v588 = vadd.f32 0.0, %v587
      %v589 = vpop.f32.mrf.mxu0
      %v590 = vadd.f32 0.0, %v589
      %591 = vmatmul.bf16.gmra.mxu0 %v419
      %v592 = vpop.f32.mrf.mxu0
      %v593 = vadd.f32 0.0, %v592
      %v594 = vpop.f32.mrf.mxu0
      %v595 = vadd.f32 0.0, %v594
      %596 = vmatmul.bf16.gmra.mxu0 %v421
      %v597 = vpop.f32.mrf.mxu0
      %v598 = vadd.f32 0.0, %v597
      %v599 = vpop.f32.mrf.mxu0
      %v600 = vadd.f32 0.0, %v599
      %601 = vmatmul.bf16.gmra.mxu0 %v423
      %v602 = vpop.f32.mrf.mxu0
      %v603 = vadd.f32 0.0, %v602
      %v604 = vpop.f32.mrf.mxu0
      %v605 = vadd.f32 0.0, %v604
      %606 = vmatmul.bf16.gmra.mxu0 %v425
      %v607 = vpop.f32.mrf.mxu0
      %v608 = vadd.f32 0.0, %v607
      %v609 = vpop.f32.mrf.mxu0
      %v610 = vadd.f32 0.0, %v609
      %611 = vmatmul.bf16.gmra.mxu0 %v427
      %v612 = vpop.f32.mrf.mxu0
      %v613 = vadd.f32 0.0, %v612
      %v614 = vpop.f32.mrf.mxu0
      %v615 = vadd.f32 0.0, %v614
      %616 = vmatmul.bf16.gmra.mxu0 %v429
      %v617 = vpop.f32.mrf.mxu0
      %v618 = vadd.f32 0.0, %v617
      %v619 = vpop.f32.mrf.mxu0
      %v620 = vadd.f32 0.0, %v619
      %621 = vmatmul.bf16.gmra.mxu0 %v431
      %v622 = vpop.f32.mrf.mxu0
      %v623 = vadd.f32 0.0, %v622
      %v624 = vpop.f32.mrf.mxu0
      %v625 = vadd.f32 0.0, %v624
      %626 = vmatmul.bf16.gmra.mxu0 %v433
      %v627 = vpop.f32.mrf.mxu0
      %v628 = vadd.f32 0.0, %v627
      %v629 = vpop.f32.mrf.mxu0
      %v630 = vadd.f32 0.0, %v629
      %631 = vmatmul.bf16.gmra.mxu0 %v435
      %v632 = vpop.f32.mrf.mxu0
      %v633 = vadd.f32 0.0, %v632
      %v634 = vpop.f32.mrf.mxu0
      %v635 = vadd.f32 0.0, %v634
      %636 = vmatmul.bf16.gmra.mxu0 %v437
      %v637 = vpop.f32.mrf.mxu0
      %v638 = vadd.f32 0.0, %v637
      %v639 = vpop.f32.mrf.mxu0
      %v640 = vadd.f32 0.0, %v639
      %641 = vmatmul.bf16.gmra.mxu0 %v439
      %v642 = vpop.f32.mrf.mxu0
      %v643 = vadd.f32 0.0, %v642
      %v644 = vpop.f32.mrf.mxu0
      %v645 = vadd.f32 0.0, %v644
      %646 = vmatmul.bf16.gmra.mxu0 %v441
      %v647 = vpop.f32.mrf.mxu0
      %v648 = vadd.f32 0.0, %v647
      %v649 = vpop.f32.mrf.mxu0
      %v650 = vadd.f32 0.0, %v649
      %651 = vmatmul.bf16.gmra.mxu0 %v443
      %v652 = vpop.f32.mrf.mxu0
      %v653 = vadd.f32 0.0, %v652
      %v654 = vpop.f32.mrf.mxu0
      %v655 = vadd.f32 0.0, %v654
      %656 = vmatmul.bf16.gmra.mxu0 %v445
      %v657 = vpop.f32.mrf.mxu0
      %v658 = vadd.f32 0.0, %v657
      %v659 = vpop.f32.mrf.mxu0
      %v660 = vadd.f32 0.0, %v659
      %661 = vmatmul.bf16.gmra.mxu0 %v447
      %v662 = vpop.f32.mrf.mxu0
      %v663 = vadd.f32 0.0, %v662
      %v664 = vpop.f32.mrf.mxu0
      %v665 = vadd.f32 0.0, %v664
      %666 = vdwg.mxu0
      %667 = vmatpush.bf16.msra.mxu0 0
      %668 = vmatpush.bf16.msra.mxu0 0
      %669 = vmatpush.bf16.msra.mxu0 0
      %670 = vmatpush.bf16.msra.mxu0 0
      %671 = vmatpush.bf16.msra.mxu0 0
      %672 = vmatpush.bf16.msra.mxu0 0
      %673 = vmatpush.bf16.msra.mxu0 %v576
      %674 = vmatpush.bf16.msra.mxu0 %v511
      %675 = vmatmul.bf16.gmra.mxu0 %v524
      %v676 = vpop.f32.mrf.mxu0
      %v677 = vadd.f32 %v588, %v676
      %v678 = vpop.f32.mrf.mxu0
      %v679 = vadd.f32 %v590, %v678
      %680 = vmatmul.bf16.gmra.mxu0 %v527
      %v681 = vpop.f32.mrf.mxu0
      %v682 = vadd.f32 %v593, %v681
      %v683 = vpop.f32.mrf.mxu0
      %v684 = vadd.f32 %v595, %v683
      %685 = vmatmul.bf16.gmra.mxu0 %v530
      %v686 = vpop.f32.mrf.mxu0
      %v687 = vadd.f32 %v598, %v686
      %v688 = vpop.f32.mrf.mxu0
      %v689 = vadd.f32 %v600, %v688
      %690 = vmatmul.bf16.gmra.mxu0 %v533
      %v691 = vpop.f32.mrf.mxu0
      %v692 = vadd.f32 %v603, %v691
      %v693 = vpop.f32.mrf.mxu0
      %v694 = vadd.f32 %v605, %v693
      %695 = vmatmul.bf16.gmra.mxu0 %v536
      %v696 = vpop.f32.mrf.mxu0
      %v697 = vadd.f32 %v608, %v696
      %v698 = vpop.f32.mrf.mxu0
      %v699 = vadd.f32 %v610, %v698
      %700 = vmatmul.bf16.gmra.mxu0 %v539
      %v701 = vpop.f32.mrf.mxu0
      %v702 = vadd.f32 %v613, %v701
      %v703 = vpop.f32.mrf.mxu0
      %v704 = vadd.f32 %v615, %v703
      %705 = vmatmul.bf16.gmra.mxu0 %v542
      %v706 = vpop.f32.mrf.mxu0
      %v707 = vadd.f32 %v618, %v706
      %v708 = vpop.f32.mrf.mxu0
      %v709 = vadd.f32 %v620, %v708
      %710 = vmatmul.bf16.gmra.mxu0 %v545
      %v711 = vpop.f32.mrf.mxu0
      %v712 = vadd.f32 %v623, %v711
      %v713 = vpop.f32.mrf.mxu0
      %v714 = vadd.f32 %v625, %v713
      %715 = vmatmul.bf16.gmra.mxu0 %v548
      %v716 = vpop.f32.mrf.mxu0
      %v717 = vadd.f32 %v628, %v716
      %v718 = vpop.f32.mrf.mxu0
      %v719 = vadd.f32 %v630, %v718
      %720 = vmatmul.bf16.gmra.mxu0 %v551
      %v721 = vpop.f32.mrf.mxu0
      %v722 = vadd.f32 %v633, %v721
      %v723 = vpop.f32.mrf.mxu0
      %v724 = vadd.f32 %v635, %v723
      %725 = vmatmul.bf16.gmra.mxu0 %v554
      %v726 = vpop.f32.mrf.mxu0
      %v727 = vadd.f32 %v638, %v726
      %v728 = vpop.f32.mrf.mxu0
      %v729 = vadd.f32 %v640, %v728
      %730 = vmatmul.bf16.gmra.mxu0 %v557
      %v731 = vpop.f32.mrf.mxu0
      %v732 = vadd.f32 %v643, %v731
      %v733 = vpop.f32.mrf.mxu0
      %v734 = vadd.f32 %v645, %v733
      %735 = vmatmul.bf16.gmra.mxu0 %v560
      %v736 = vpop.f32.mrf.mxu0
      %v737 = vadd.f32 %v648, %v736
      %v738 = vpop.f32.mrf.mxu0
      %v739 = vadd.f32 %v650, %v738
      %740 = vmatmul.bf16.gmra.mxu0 %v563
      %v741 = vpop.f32.mrf.mxu0
      %v742 = vadd.f32 %v653, %v741
      %v743 = vpop.f32.mrf.mxu0
      %v744 = vadd.f32 %v655, %v743
      %745 = vmatmul.bf16.gmra.mxu0 %v566
      %v746 = vpop.f32.mrf.mxu0
      %v747 = vadd.f32 %v658, %v746
      %v748 = vpop.f32.mrf.mxu0
      %v749 = vadd.f32 %v660, %v748
      %750 = vmatmul.bf16.gmra.mxu0 %v569
      %v751 = vpop.f32.mrf.mxu0
      %v752 = vadd.f32 %v663, %v751
      %v753 = vpop.f32.mrf.mxu0
      %v754 = vadd.f32 %v665, %v753
      %755 = vdwg.mxu0
      %v756 = vld [vmem:[%s256] sm:$0x1]
      %v758 = vperm.slane %v756, 0
      %v760 = vmul.f32 %v677, %v758
      %v761 = vmul.f32 %v679, %v758
      %v762 = vmul.f32 %v682, %v758
      %v763 = vmul.f32 %v684, %v758
      %v764 = vmul.f32 %v687, %v758
      %v765 = vmul.f32 %v689, %v758
      %v766 = vmul.f32 %v692, %v758
      %v767 = vmul.f32 %v694, %v758
      %v768 = vmul.f32 %v697, %v758
      %v769 = vmul.f32 %v699, %v758
      %v770 = vmul.f32 %v702, %v758
      %v771 = vmul.f32 %v704, %v758
      %v772 = vmul.f32 %v707, %v758
      %v773 = vmul.f32 %v709, %v758
      %v774 = vmul.f32 %v712, %v758
      %v775 = vmul.f32 %v714, %v758
      %v776 = vmul.f32 %v717, %v758
      %v777 = vmul.f32 %v719, %v758
      %v778 = vmul.f32 %v722, %v758
      %v779 = vmul.f32 %v724, %v758
      %v780 = vmul.f32 %v727, %v758
      %v781 = vmul.f32 %v729, %v758
      %v782 = vmul.f32 %v732, %v758
      %v783 = vmul.f32 %v734, %v758
      %v784 = vmul.f32 %v737, %v758
      %v785 = vmul.f32 %v739, %v758
      %v786 = vmul.f32 %v742, %v758
      %v787 = vmul.f32 %v744, %v758
      %v788 = vmul.f32 %v747, %v758
      %v789 = vmul.f32 %v749, %v758
      %v790 = vmul.f32 %v752, %v758
      %v791 = vmul.f32 %v754, %v758
      %v792 = vld [vmem:[%s259] sm:$0x1]
      %v794 = vperm.slane %v792, 0
      %v796 = vadd.f32 %v760, %v794
      %v797 = vadd.f32 %v761, %v794
      %v798 = vadd.f32 %v762, %v794
      %v799 = vadd.f32 %v763, %v794
      %v800 = vadd.f32 %v764, %v794
      %v801 = vadd.f32 %v765, %v794
      %v802 = vadd.f32 %v766, %v794
      %v803 = vadd.f32 %v767, %v794
      %v804 = vadd.f32 %v768, %v794
      %v805 = vadd.f32 %v769, %v794
      %v806 = vadd.f32 %v770, %v794
      %v807 = vadd.f32 %v771, %v794
      %v808 = vadd.f32 %v772, %v794
      %v809 = vadd.f32 %v773, %v794
      %v810 = vadd.f32 %v774, %v794
      %v811 = vadd.f32 %v775, %v794
      %v812 = vadd.f32 %v776, %v794
      %v813 = vadd.f32 %v777, %v794
      %v814 = vadd.f32 %v778, %v794
      %v815 = vadd.f32 %v779, %v794
      %v816 = vadd.f32 %v780, %v794
      %v817 = vadd.f32 %v781, %v794
      %v818 = vadd.f32 %v782, %v794
      %v819 = vadd.f32 %v783, %v794
      %v820 = vadd.f32 %v784, %v794
      %v821 = vadd.f32 %v785, %v794
      %v822 = vadd.f32 %v786, %v794
      %v823 = vadd.f32 %v787, %v794
      %v824 = vadd.f32 %v788, %v794
      %v825 = vadd.f32 %v789, %v794
      %v826 = vadd.f32 %v790, %v794
      %v827 = vadd.f32 %v791, %v794
      %v828 = vmax.f32 %v796, 0.0
      %v829 = vmax.f32 %v797, 0.0
      %v830 = vmax.f32 %v798, 0.0
      %v831 = vmax.f32 %v799, 0.0
      %v832 = vmax.f32 %v800, 0.0
      %v833 = vmax.f32 %v801, 0.0
      %v834 = vmax.f32 %v802, 0.0
      %v835 = vmax.f32 %v803, 0.0
      %v836 = vmax.f32 %v804, 0.0
      %v837 = vmax.f32 %v805, 0.0
      %v838 = vmax.f32 %v806, 0.0
      %v839 = vmax.f32 %v807, 0.0
      %v840 = vmax.f32 %v808, 0.0
      %v841 = vmax.f32 %v809, 0.0
      %v842 = vmax.f32 %v810, 0.0
      %v843 = vmax.f32 %v811, 0.0
      %v844 = vmax.f32 %v812, 0.0
      %v845 = vmax.f32 %v813, 0.0
      %v846 = vmax.f32 %v814, 0.0
      %v847 = vmax.f32 %v815, 0.0
      %v848 = vmax.f32 %v816, 0.0
      %v849 = vmax.f32 %v817, 0.0
      %v850 = vmax.f32 %v818, 0.0
      %v851 = vmax.f32 %v819, 0.0
      %v852 = vmax.f32 %v820, 0.0
      %v853 = vmax.f32 %v821, 0.0
      %v854 = vmax.f32 %v822, 0.0
      %v855 = vmax.f32 %v823, 0.0
      %v856 = vmax.f32 %v824, 0.0
      %v857 = vmax.f32 %v825, 0.0
      %v858 = vmax.f32 %v826, 0.0
      %v859 = vmax.f32 %v827, 0.0
      %vm860 = vcmask 523264
      %861 = vst.msk [vmem:[%s267] sm:$0xff] %vm860, %v828
      %862 = vst.msk [vmem:[%s267 + $0x8] sm:$0xff] %vm860, %v829
      %863 = vst.msk [vmem:[%s267 + $0x10] sm:$0xff] %vm860, %v830
      %864 = vst.msk [vmem:[%s267 + $0x18] sm:$0xff] %vm860, %v831
      %865 = vst.msk [vmem:[%s267 + $0x20] sm:$0xff] %vm860, %v832
      %866 = vst.msk [vmem:[%s267 + $0x28] sm:$0xff] %vm860, %v833
      %867 = vst.msk [vmem:[%s267 + $0x30] sm:$0xff] %vm860, %v834
      %868 = vst.msk [vmem:[%s267 + $0x38] sm:$0xff] %vm860, %v835
      %869 = vst.msk [vmem:[%s267 + $0x40] sm:$0xff] %vm860, %v836
      %870 = vst.msk [vmem:[%s267 + $0x48] sm:$0xff] %vm860, %v837
      %871 = vst.msk [vmem:[%s267 + $0x50] sm:$0xff] %vm860, %v838
      %872 = vst.msk [vmem:[%s267 + $0x58] sm:$0xff] %vm860, %v839
      %873 = vst.msk [vmem:[%s267 + $0x60] sm:$0xff] %vm860, %v840
      %874 = vst.msk [vmem:[%s267 + $0x68] sm:$0xff] %vm860, %v841
      %875 = vst.msk [vmem:[%s267 + $0x70] sm:$0xff] %vm860, %v842
      %876 = vst.msk [vmem:[%s267 + $0x78] sm:$0xff] %vm860, %v843
      %877 = vst.msk [vmem:[%s267 + $0x80] sm:$0xff] %vm860, %v844
      %878 = vst.msk [vmem:[%s267 + $0x88] sm:$0xff] %vm860, %v845
      %879 = vst.msk [vmem:[%s267 + $0x90] sm:$0xff] %vm860, %v846
      %880 = vst.msk [vmem:[%s267 + $0x98] sm:$0xff] %vm860, %v847
      %881 = vst.msk [vmem:[%s267 + $0xa0] sm:$0xff] %vm860, %v848
      %882 = vst.msk [vmem:[%s267 + $0xa8] sm:$0xff] %vm860, %v849
      %883 = vst.msk [vmem:[%s267 + $0xb0] sm:$0xff] %vm860, %v850
      %884 = vst.msk [vmem:[%s267 + $0xb8] sm:$0xff] %vm860, %v851
      %885 = vst.msk [vmem:[%s267 + $0xc0] sm:$0xff] %vm860, %v852
      %886 = vst.msk [vmem:[%s267 + $0xc8] sm:$0xff] %vm860, %v853
      %887 = vst.msk [vmem:[%s267 + $0xd0] sm:$0xff] %vm860, %v854
      %888 = vst.msk [vmem:[%s267 + $0xd8] sm:$0xff] %vm860, %v855
      %889 = vst.msk [vmem:[%s267 + $0xe0] sm:$0xff] %vm860, %v856
      %890 = vst.msk [vmem:[%s267 + $0xe8] sm:$0xff] %vm860, %v857
      %891 = vst.msk [vmem:[%s267 + $0xf0] sm:$0xff] %vm860, %v858
      %892 = vst.msk [vmem:[%s267 + $0xf8] sm:$0xff] %vm860, %v859
      %s893 = smul.u32 32, %s19
      %p894 = scmp.lt.s32.totalorder %s893, 63
      %s895 = scalar_select %p894, %s893, 63
      %p896 = scmp.lt.s32.totalorder %s20, 0
      %s897 = scalar_select %p896, %s20, 0
      %s898 = sadd.s32 %s897, %s895
      %s899 = smul.addr %s898, 8
      %s900 = scalar_lea.vmem %s4, %s899
      // Predicated region
      $region37: #{tpu_custom_call.1} parent=35 // pred_check
        %p901 = pneg %p151
      $region38: #{tpu_custom_call.1} parent=35 // pred_check_branch
        %903 = sbr.rel (%p901) target = $region40
      $region39: #{tpu_custom_call.1} parent=35 // pred_region
        %s904 = smul.u32 32, %s19
      $region40: #{tpu_custom_call.1} parent=35 // pred_fallthru
        _
    $region36: #{tpu_custom_call.1} parent=5 // pred_fallthru
      _
    %p905 = scmp.le.s32.totalorder 2, %s10
    // Predicated region
    $region41: #{tpu_custom_call.1} parent=5 // pred_check
      %p906 = pneg %p905
    $region42: #{tpu_custom_call.1} parent=5 // pred_check_branch
      %908 = sbr.rel (%p906) target = $region44
    $region43: #{tpu_custom_call.1} parent=5 // pred_region
      %s909 = ssub.s32 %s10, 2
      // Predicated region
      $region45: #{tpu_custom_call.1} parent=43 // pred_check
        %p910 = pneg %p157
      $region46: #{tpu_custom_call.1} parent=43 // pred_check_branch
        %912 = sbr.rel (%p910) target = $region48
      $region47: #{tpu_custom_call.1} parent=43 // pred_region
        %s913 = smul.u32 32, %s21
        %p914 = scmp.lt.s32.totalorder %s913, 63
        %s915 = scalar_select %p914, %s913, 63
        %p916 = scmp.lt.s32.totalorder %s22, 0
        %s917 = scalar_select %p916, %s22, 0
        %s918 = sadd.s32 %s917, %s915
        %s919 = smul.addr %s918, 8
        %s920 = scalar_lea.vmem %s4, %s919
      $region48: #{tpu_custom_call.1} parent=43 // pred_fallthru
        _
    $region44: #{tpu_custom_call.1} parent=5 // pred_fallthru
      _
  $region6: #{tpu_custom_call.1} parent=0 // loop_footer
    %s14 = sadd.s32 1, %s10
  $region7: #{tpu_custom_call.1} parent=0 // loop_footer_branch
    %9 = sbr.rel target = $region3
  $region8: #{tpu_custom_call.1} parent=0 // loop_exit
    _

</llo_original>
